<compile_context>
chip_gen: v6e
topology: v6e:2x2x1
jax: 0.10.0
libtpu: 0.0.40
codegen_flags: <defaults>
</compile_context>

<pallas_src>
import functools

import jax
import jax.numpy as jnp
from jax import lax
from jax.experimental import pallas as pl
from jax.experimental.pallas import tpu as pltpu


def _se_gate_conv1x1_kernel(gate_ref, w_ref, x_ref, o_ref, *, bf16_gating):
    # gate_ref: (1, Cin)   w_ref: (Cout, Cin)   x_ref: (Cin, M)   o_ref: (Cout, M)
    # Sigmoid on the EUP, always in f32 (only Cin values — cheap and precise).
    g = jax.nn.sigmoid(gate_ref[...].astype(jnp.float32))                 # (1, Cin)

    if bf16_gating:
        # v6e/v7x: bf16 VALUs — scale the weight rows directly in bf16
        # (skips an f32 up/downcast pass over the whole (Cout, Cin) weight).
        w_scaled = w_ref[...].astype(jnp.bfloat16) * g.astype(jnp.bfloat16)
    else:
        # v5e and older: no bf16 VPU — do the gating multiply in f32.
        w_scaled = (w_ref[...].astype(jnp.float32) * g).astype(jnp.bfloat16)

    x_mxu = x_ref[...].astype(jnp.bfloat16)                               # no-op if bf16
    # out[o, m] = sum_c (w[o,c] * sigmoid(gate[c])) * x[c,m]   (contract Cin)
    o_ref[...] = lax.dot_general(
        w_scaled, x_mxu,
        dimension_numbers=(((1,), (0,)), ((), ())),
        preferred_element_type=jnp.float32,
    ).astype(o_ref.dtype)


def _has_bf16_vpu() -> bool:
    """v6e/v7x (and newer) have bf16 VALUs; v5e and older do not."""
    try:
        kind = jax.devices()[0].device_kind.lower()
    except Exception:
        return True
    return not any(tag in kind for tag in ("v2", "v3", "v4", "v5"))


def se_gate_conv1x1(x_nchw, gate_nc11, w_oihw, *, out_dtype=None):
    """sigmoid(gate) * x, then 1x1 conv (no bias). NCHW in / NCHW out.

    x / w are consumed in whatever dtype the caller provides (bf16 recommended:
    cast the weight once at init and keep the activation path bf16 upstream —
    a per-call wrapper cast would just add an extra HBM round-trip).
    """
    n, cin, h, wd = x_nchw.shape
    cout = w_oihw.shape[0]
    m = h * wd
    out_dtype = x_nchw.dtype if out_dtype is None else out_dtype

    # Pure-metadata reshapes (no transposes, no data movement).
    x_ncm = x_nchw.reshape(n, cin, m)          # (N, 672, 196)
    gate = gate_nc11.reshape(n, 1, cin)        # (N, 1, 672)
    w_oc = w_oihw.reshape(cout, cin)           # (112, 672)

    kernel = functools.partial(
        _se_gate_conv1x1_kernel, bf16_gating=_has_bf16_vpu()
    )

    # Advisory cost hint reflecting the actual (bf16) byte traffic.
    bytes_accessed = (
        x_ncm.size * x_ncm.dtype.itemsize
        + w_oc.size * w_oc.dtype.itemsize
        + gate.size * gate.dtype.itemsize
        + n * cout * m * jnp.dtype(out_dtype).itemsize
    )
    cost = pl.CostEstimate(
        flops=2 * n * cout * cin * m,
        transcendentals=n * cin,
        bytes_accessed=bytes_accessed,
    )

    out_ncm = pl.pallas_call(
        kernel,
        out_shape=jax.ShapeDtypeStruct((n, cout, m), out_dtype),
        # One grid step per batch image; at N=1 this is effectively gridless.
        # Working set per step (~0.5 MB in bf16) is far under every generation's
        # VMEM budget, so each operand is a single full-extent block.
        grid=(n,),
        in_specs=[
            pl.BlockSpec((None, 1, cin), lambda i: (i, 0, 0)),     # gate -> (1, Cin)
            pl.BlockSpec((cout, cin), lambda i: (0, 0)),           # w    -> (Cout, Cin)
            pl.BlockSpec((None, cin, m), lambda i: (i, 0, 0)),     # x    -> (Cin, M)
        ],
        out_specs=pl.BlockSpec((None, cout, m), lambda i: (i, 0, 0)),
        compiler_params=pltpu.CompilerParams(
            dimension_semantics=("parallel",),
        ),
        cost_estimate=cost,
    )(gate, w_oc, x_ncm)

    # (N, Cout, M) -> NCHW is again a free reshape.
    return out_ncm.reshape(n, cout, h, wd)


if __name__ == "__main__":
    key = jax.random.PRNGKey(0)
    k1, k2, k3 = jax.random.split(key, 3)

    N, CIN, H, W, COUT = 1, 672, 14, 14, 112

    x235_f32 = jax.random.normal(k1, (N, CIN, H, W), dtype=jnp.float32)   # feature map
    x239 = jax.random.normal(k2, (N, CIN, 1, 1), dtype=jnp.float32)       # SE gate logits
    w_f32 = jax.random.normal(k3, (COUT, CIN, 1, 1), dtype=jnp.float32) * 0.02

    # Producer-side bf16: weight cast once at parameter-init time, activation
    # path bf16 through the model (not a per-call cast inside the hot path).
    x235 = x235_f32.astype(jnp.bfloat16)
    w = w_f32.astype(jnp.bfloat16)

    fn = jax.jit(se_gate_conv1x1)
    out = fn(x235, x239, w)
    jax.block_until_ready(out)

    # f32 reference computed on the SAME bf16-valued inputs (isolates kernel
    # error from the intentional input quantization).
    ref = lax.conv_general_dilated(
        jax.nn.sigmoid(x239) * x235.astype(jnp.float32),
        w.astype(jnp.float32),
        window_strides=(1, 1), padding="VALID",
        dimension_numbers=("NCHW", "OIHW", "NCHW"),
    )
    assert out.shape == (N, COUT, H, W)
    assert out.dtype == jnp.bfloat16
    assert jnp.allclose(out.astype(jnp.float32), ref, atol=2e-2, rtol=2e-2)

    print("KERNEL_OK")
</pallas_src>

<mosaic_0001>
module attributes {stable_mosaic.version = 11 : i64} {
  func.func @_se_gate_conv1x1_kernel(%arg0: i32, %arg1: memref<1x1x672xf32, #tpu.memory_space<vmem>>, %arg2: memref<112x672xbf16, #tpu.memory_space<vmem>>, %arg3: memref<1x672x196xbf16, #tpu.memory_space<vmem>>, %arg4: memref<1x112x196xbf16, #tpu.memory_space<vmem>>) attributes {dimension_semantics = [#tpu.dimension_semantics<parallel>], iteration_bounds = array<i64: 1>, scalar_prefetch = 0 : i64, scratch_operands = 0 : i64, tpu.core_type = #tpu.core_type<tc>, window_params = [{transform_indices = @transform_0, window_bounds = array<i64: 1, 1, 672>}, {pipeline_mode = #tpu.pipeline_mode<synchronous>, transform_indices = @transform_1, window_bounds = array<i64: 112, 672>}, {transform_indices = @transform_2, window_bounds = array<i64: 1, 672, 196>}, {transform_indices = @transform_3, window_bounds = array<i64: 1, 112, 196>}]} {
    %c0 = arith.constant 0 : index
    %c0_0 = arith.constant 0 : index
    %c0_1 = arith.constant 0 : index
    %0 = vector.load %arg1[%c0, %c0_0, %c0_1] : memref<1x1x672xf32, #tpu.memory_space<vmem>>, vector<1x1x672xf32>
    %1 = vector.shape_cast %0 : vector<1x1x672xf32> to vector<1x672xf32>
    %2 = arith.negf %1 : vector<1x672xf32>
    %3 = math.exp %2 : vector<1x672xf32>
    %cst = arith.constant 1.000000e+00 : f32
    %4 = vector.broadcast %cst : f32 to vector<1x672xf32>
    %5 = arith.addf %4, %3 : vector<1x672xf32>
    %6 = arith.divf %4, %5 : vector<1x672xf32>
    %c0_2 = arith.constant 0 : index
    %c0_3 = arith.constant 0 : index
    %7 = vector.load %arg2[%c0_2, %c0_3] : memref<112x672xbf16, #tpu.memory_space<vmem>>, vector<112x672xbf16>
    %8 = arith.truncf %6 : vector<1x672xf32> to vector<1x672xbf16>
    %9 = vector.broadcast %8 : vector<1x672xbf16> to vector<112x672xbf16>
    %10 = arith.mulf %7, %9 : vector<112x672xbf16>
    %c0_4 = arith.constant 0 : index
    %c0_5 = arith.constant 0 : index
    %c0_6 = arith.constant 0 : index
    %11 = vector.load %arg3[%c0_4, %c0_5, %c0_6] : memref<1x672x196xbf16, #tpu.memory_space<vmem>>, vector<1x672x196xbf16>
    %12 = vector.shape_cast %11 : vector<1x672x196xbf16> to vector<672x196xbf16>
    %cst_7 = arith.constant dense<0.000000e+00> : vector<112x196xf32>
    %13 = tpu.matmul %10, %12, %cst_7 {dimension_numbers = #tpu.dot_dimension_numbers<[1], [0], [0], [1], [0, 0, 1, 1], [], []>} : vector<112x672xbf16>, vector<672x196xbf16>, vector<112x196xf32> -> vector<112x196xf32>
    %14 = arith.truncf %13 : vector<112x196xf32> to vector<112x196xbf16>
    %c0_8 = arith.constant 0 : index
    %c0_9 = arith.constant 0 : index
    %c0_10 = arith.constant 0 : index
    %15 = vector.load %arg4[%c0_8, %c0_9, %c0_10] : memref<1x112x196xbf16, #tpu.memory_space<vmem>>, vector<1x112x196xbf16>
    %16 = vector.shape_cast %15 : vector<1x112x196xbf16> to vector<112x196xbf16>
    %17 = vector.shape_cast %14 : vector<112x196xbf16> to vector<1x112x196xbf16>
    tpu.vector_store %arg4[%c0_8, %c0_9, %c0_10], %17 {strides = array<i32>} : memref<1x112x196xbf16, #tpu.memory_space<vmem>>, vector<1x112x196xbf16>,
    return
  }
  func.func @transform_0(%arg0: i32) -> (i32, i32, i32) {
    %c0_i32 = arith.constant 0 : i32
    %c0_i32_0 = arith.constant 0 : i32
    %c0_i32_1 = arith.constant 0 : i32
    return %arg0, %c0_i32, %c0_i32_0 : i32, i32, i32
  }
  func.func @transform_1(%arg0: i32) -> (i32, i32) {
    %c0_i32 = arith.constant 0 : i32
    %c0_i32_0 = arith.constant 0 : i32
    %c0_i32_1 = arith.constant 0 : i32
    return %c0_i32, %c0_i32_0 : i32, i32
  }
  func.func @transform_2(%arg0: i32) -> (i32, i32, i32) {
    %c0_i32 = arith.constant 0 : i32
    %c0_i32_0 = arith.constant 0 : i32
    %c0_i32_1 = arith.constant 0 : i32
    return %arg0, %c0_i32, %c0_i32_0 : i32, i32, i32
  }
  func.func @transform_3(%arg0: i32) -> (i32, i32, i32) {
    %c0_i32 = arith.constant 0 : i32
    %c0_i32_0 = arith.constant 0 : i32
    %c0_i32_1 = arith.constant 0 : i32
    return %arg0, %c0_i32, %c0_i32_0 : i32, i32, i32
  }
}

</mosaic_0001>

<llo_original>
// kernel: se_gate_conv1x1.1
$region0: #{se_gate_conv1x1.1}
  #allocation0 [shape = 'u32[]', space=smem, size = 0x4, offset = 0x4, fixed_abs, tag = 'smem constant byte address 0x4 - core index']
  #allocation1 [shape = 'u32[144,128]{1,0:T(1,128)}', space=vmem, size = 0x12000, scoped, tag = 'internal scratch']
  %s0 = inlined_call_operand.vmem [shape: f32[1,1,672], index: 0, kind: input, shape index: {}]
  %s1 = inlined_call_operand.vmem [shape: bf16[112,672], index: 1, kind: input, shape index: {}]
  %s2 = inlined_call_operand.vmem [shape: bf16[1,672,196], index: 2, kind: input, shape index: {}]
  %s3 = inlined_call_operand.vmem [shape: bf16[1,112,196], index: 3, kind: output, shape index: {}]
  %s4 = sld [smem:[#allocation0]]
  $region22: #{se_gate_conv1x1.1} parent=0
    _
  %s6 = ssub.s32 1, %s4
  %s7 = scalar_select 0, %s6, %s4
  // Predicated region
  $region2: #{se_gate_conv1x1.1} parent=0 // pred_check
    _
  $region3: #{se_gate_conv1x1.1} parent=0 // pred_check_branch
    %9 = sbr.rel (0) target = $region5
  $region4: #{se_gate_conv1x1.1} parent=0 // pred_region
    _
  $region5: #{se_gate_conv1x1.1} parent=0 // pred_fallthru
    _
  // Predicated region
  $region6: #{se_gate_conv1x1.1} parent=0 // pred_check
    _
  $region7: #{se_gate_conv1x1.1} parent=0 // pred_check_branch
    %11 = sbr.rel (0) target = $region9
  $region8: #{se_gate_conv1x1.1} parent=0 // pred_region
    _
  $region9: #{se_gate_conv1x1.1} parent=0 // pred_fallthru
    _
  // Predicated region
  $region10: #{se_gate_conv1x1.1} parent=0 // pred_check
    _
  $region11: #{se_gate_conv1x1.1} parent=0 // pred_check_branch
    %13 = sbr.rel (0) target = $region13
  $region12: #{se_gate_conv1x1.1} parent=0 // pred_region
    _
  $region13: #{se_gate_conv1x1.1} parent=0 // pred_fallthru
    _
  %v15 = vld [vmem:[%s0] sm:$0x3f]
  %v16 = vxor.u32 %v15, 2147483648
  %v17 = vmul.f32 %v16, 1.442695
  %v18 = vpow.pop %v17
  %v19 = vadd.f32 %v18, 1.0
  %v20 = vrcp.pop %v19
  %v21 = vmul.f32 1.0, %v20
  %v22 = vld [vmem:[%s1] sm:$0xff]
  %v23 = vld [vmem:[%s1 + $0x8] sm:$0xff]
  %v24 = vld [vmem:[%s1 + $0x10] sm:$0xff]
  %v25 = vld [vmem:[%s1 + $0x18] sm:$0xff]
  %v26 = vld [vmem:[%s1 + $0x20] sm:$0xff]
  %v27 = vld [vmem:[%s1 + $0x28] sm:$0xff]
  %v28 = vld [vmem:[%s1 + $0x30] sm:$0xff]
  %v29 = vld [vmem:[%s1 + $0x38] sm:$0xff]
  %v30 = vld [vmem:[%s1 + $0x40] sm:$0xff]
  %v31 = vld [vmem:[%s1 + $0x48] sm:$0xff]
  %v32 = vld [vmem:[%s1 + $0x50] sm:$0xff]
  %v33 = vld [vmem:[%s1 + $0x58] sm:$0xff]
  %v34 = vld [vmem:[%s1 + $0x60] sm:$0xff]
  %v35 = vld [vmem:[%s1 + $0x68] sm:$0xff]
  %v36 = vld [vmem:[%s1 + $0x70] sm:$0xff]
  %v37 = vld [vmem:[%s1 + $0x78] sm:$0xff]
  %v38 = vld [vmem:[%s1 + $0x80] sm:$0xff]
  %v39 = vld [vmem:[%s1 + $0x88] sm:$0xff]
  %v40 = vld [vmem:[%s1 + $0x90] sm:$0xff]
  %v41 = vld [vmem:[%s1 + $0x98] sm:$0xff]
  %v42 = vld [vmem:[%s1 + $0xa0] sm:$0xff]
  %v43 = vld [vmem:[%s1 + $0xa8] sm:$0xff]
  %v44 = vld [vmem:[%s1 + $0xb0] sm:$0xff]
  %v45 = vld [vmem:[%s1 + $0xb8] sm:$0xff]
  %v46 = vld [vmem:[%s1 + $0xc0] sm:$0xff]
  %v47 = vld [vmem:[%s1 + $0xc8] sm:$0xff]
  %v48 = vld [vmem:[%s1 + $0xd0] sm:$0xff]
  %v49 = vld [vmem:[%s1 + $0xd8] sm:$0xff]
  %v50 = vld [vmem:[%s1 + $0xe0] sm:$0xff]
  %v51 = vld [vmem:[%s1 + $0xe8] sm:$0xff]
  %v52 = vld [vmem:[%s1 + $0xf0] sm:$0xff]
  %v53 = vld [vmem:[%s1 + $0xf8] sm:$0xff]
  %v54 = vld [vmem:[%s1 + $0x100] sm:$0xff]
  %v55 = vld [vmem:[%s1 + $0x108] sm:$0xff]
  %v56 = vld [vmem:[%s1 + $0x110] sm:$0xff]
  %v57 = vld [vmem:[%s1 + $0x118] sm:$0xff]
  %v58 = vld [vmem:[%s1 + $0x120] sm:$0xff]
  %v59 = vld [vmem:[%s1 + $0x128] sm:$0xff]
  %v60 = vld [vmem:[%s1 + $0x130] sm:$0xff]
  %v61 = vld [vmem:[%s1 + $0x138] sm:$0xff]
  %v62 = vld [vmem:[%s1 + $0x140] sm:$0xff]
  %v63 = vld [vmem:[%s1 + $0x148] sm:$0xff]
  %v65 = vlaneseq
  %v66 = vshrl.u32 %v65, 7
  %v67 = vsub.s32 0, %v66
  %v68 = vrot.slane %v21, %v67
  %v69 = vlaneseq
  %v70 = vshrl.u32 %v69, 7
  %v71 = vsub.s32 1, %v70
  %v72 = vrot.slane %v21, %v71
  %v73 = vlaneseq
  %v74 = vshrl.u32 %v73, 7
  %v75 = vsub.s32 2, %v74
  %v76 = vrot.slane %v21, %v75
  %v77 = vlaneseq
  %v78 = vshrl.u32 %v77, 7
  %v79 = vsub.s32 3, %v78
  %v80 = vrot.slane %v21, %v79
  %v81 = vlaneseq
  %v82 = vshrl.u32 %v81, 7
  %v83 = vsub.s32 4, %v82
  %v84 = vrot.slane %v21, %v83
  %v85 = vlaneseq
  %v86 = vshrl.u32 %v85, 7
  %v87 = vsub.s32 5, %v86
  %v88 = vrot.slane %v21, %v87
  %v95 = vpack.c.bf16 %v68, %v68
  %v96 = vpack.c.bf16 %v72, %v72
  %v97 = vpack.c.bf16 %v76, %v76
  %v98 = vpack.c.bf16 %v80, %v80
  %v99 = vpack.c.bf16 %v84, %v84
  %v100 = vpack.c.bf16 %v88, %v88
  %v102 = vpack.i.b16 %v95, %v95
  %v104 = vlaneseq
  %v105 = vshrl.u32 %v104, 7
  %v106 = vsub.s32 0, %v105
  %v107 = vrot.slane %v102, %v106
  %v109 = vpack.i.b16 %v96, %v96
  %v111 = vlaneseq
  %v112 = vshrl.u32 %v111, 7
  %v113 = vsub.s32 0, %v112
  %v114 = vrot.slane %v109, %v113
  %v116 = vpack.i.b16 %v97, %v97
  %v118 = vlaneseq
  %v119 = vshrl.u32 %v118, 7
  %v120 = vsub.s32 0, %v119
  %v121 = vrot.slane %v116, %v120
  %v123 = vpack.i.b16 %v98, %v98
  %v125 = vlaneseq
  %v126 = vshrl.u32 %v125, 7
  %v127 = vsub.s32 0, %v126
  %v128 = vrot.slane %v123, %v127
  %v130 = vpack.i.b16 %v99, %v99
  %v132 = vlaneseq
  %v133 = vshrl.u32 %v132, 7
  %v134 = vsub.s32 0, %v133
  %v135 = vrot.slane %v130, %v134
  %v137 = vpack.i.b16 %v100, %v100
  %v139 = vlaneseq
  %v140 = vshrl.u32 %v139, 7
  %v141 = vsub.s32 0, %v140
  %v142 = vrot.slane %v137, %v141
  %v149 = vunpack.c.l.b16 %v107
  %v150 = vunpack.c.l.b16 %v114
  %v151 = vunpack.c.l.b16 %v121
  %v152 = vunpack.c.l.b16 %v128
  %v153 = vunpack.c.l.b16 %v135
  %v154 = vunpack.c.l.b16 %v142
  %v155 = vpack.c.b16 %v150, %v149
  %v156 = vpack.c.b16 %v152, %v151
  %v157 = vpack.c.b16 %v154, %v153
  %v161 = vmul.bf16 %v22, %v155
  %v162 = vmul.bf16 %v23, %v156
  %v163 = vmul.bf16 %v24, %v157
  %v164 = vmul.bf16 %v25, %v155
  %v165 = vmul.bf16 %v26, %v156
  %v166 = vmul.bf16 %v27, %v157
  %v167 = vmul.bf16 %v28, %v155
  %v168 = vmul.bf16 %v29, %v156
  %v169 = vmul.bf16 %v30, %v157
  %v170 = vmul.bf16 %v31, %v155
  %v171 = vmul.bf16 %v32, %v156
  %v172 = vmul.bf16 %v33, %v157
  %v173 = vmul.bf16 %v34, %v155
  %v174 = vmul.bf16 %v35, %v156
  %v175 = vmul.bf16 %v36, %v157
  %v176 = vmul.bf16 %v37, %v155
  %v177 = vmul.bf16 %v38, %v156
  %v178 = vmul.bf16 %v39, %v157
  %v179 = vmul.bf16 %v40, %v155
  %v180 = vmul.bf16 %v41, %v156
  %v181 = vmul.bf16 %v42, %v157
  %v182 = vmul.bf16 %v43, %v155
  %v183 = vmul.bf16 %v44, %v156
  %v184 = vmul.bf16 %v45, %v157
  %v185 = vmul.bf16 %v46, %v155
  %v186 = vmul.bf16 %v47, %v156
  %v187 = vmul.bf16 %v48, %v157
  %v188 = vmul.bf16 %v49, %v155
  %v189 = vmul.bf16 %v50, %v156
  %v190 = vmul.bf16 %v51, %v157
  %v191 = vmul.bf16 %v52, %v155
  %v192 = vmul.bf16 %v53, %v156
  %v193 = vmul.bf16 %v54, %v157
  %v194 = vmul.bf16 %v55, %v155
  %v195 = vmul.bf16 %v56, %v156
  %v196 = vmul.bf16 %v57, %v157
  %v197 = vmul.bf16 %v58, %v155
  %v198 = vmul.bf16 %v59, %v156
  %v199 = vmul.bf16 %v60, %v157
  %v200 = vmul.bf16 %v61, %v155
  %v201 = vmul.bf16 %v62, %v156
  %v202 = vmul.bf16 %v63, %v157
  %v203 = vld [vmem:[%s2] sm:$0xff]
  %v204 = vld [vmem:[%s2 + $0x8] sm:$0xff]
  %v205 = vld [vmem:[%s2 + $0x10] sm:$0xff]
  %v206 = vld [vmem:[%s2 + $0x18] sm:$0xff]
  %v207 = vld [vmem:[%s2 + $0x20] sm:$0xff]
  %v208 = vld [vmem:[%s2 + $0x28] sm:$0xff]
  %v209 = vld [vmem:[%s2 + $0x30] sm:$0xff]
  %v210 = vld [vmem:[%s2 + $0x38] sm:$0xff]
  %v211 = vld [vmem:[%s2 + $0x40] sm:$0xff]
  %v212 = vld [vmem:[%s2 + $0x48] sm:$0xff]
  %v213 = vld [vmem:[%s2 + $0x50] sm:$0xff]
  %v214 = vld [vmem:[%s2 + $0x58] sm:$0xff]
  %v215 = vld [vmem:[%s2 + $0x60] sm:$0xff]
  %v216 = vld [vmem:[%s2 + $0x68] sm:$0xff]
  %v217 = vld [vmem:[%s2 + $0x70] sm:$0xff]
  %v218 = vld [vmem:[%s2 + $0x78] sm:$0xff]
  %v219 = vld [vmem:[%s2 + $0x80] sm:$0xff]
  %v220 = vld [vmem:[%s2 + $0x88] sm:$0xff]
  %v221 = vld [vmem:[%s2 + $0x90] sm:$0xff]
  %v222 = vld [vmem:[%s2 + $0x98] sm:$0xff]
  %v223 = vld [vmem:[%s2 + $0xa0] sm:$0xff]
  %v224 = vld [vmem:[%s2 + $0xa8] sm:$0xff]
  %v225 = vld [vmem:[%s2 + $0xb0] sm:$0xff]
  %v226 = vld [vmem:[%s2 + $0xb8] sm:$0xff]
  %v227 = vld [vmem:[%s2 + $0xc0] sm:$0xff]
  %v228 = vld [vmem:[%s2 + $0xc8] sm:$0xff]
  %v229 = vld [vmem:[%s2 + $0xd0] sm:$0xff]
  %v230 = vld [vmem:[%s2 + $0xd8] sm:$0xff]
  %v231 = vld [vmem:[%s2 + $0xe0] sm:$0xff]
  %v232 = vld [vmem:[%s2 + $0xe8] sm:$0xff]
  %v233 = vld [vmem:[%s2 + $0xf0] sm:$0xff]
  %v234 = vld [vmem:[%s2 + $0xf8] sm:$0xff]
  %v235 = vld [vmem:[%s2 + $0x100] sm:$0xff]
  %v236 = vld [vmem:[%s2 + $0x108] sm:$0xff]
  %v237 = vld [vmem:[%s2 + $0x110] sm:$0xff]
  %v238 = vld [vmem:[%s2 + $0x118] sm:$0xff]
  %v239 = vld [vmem:[%s2 + $0x120] sm:$0xff]
  %v240 = vld [vmem:[%s2 + $0x128] sm:$0xff]
  %v241 = vld [vmem:[%s2 + $0x130] sm:$0xff]
  %v242 = vld [vmem:[%s2 + $0x138] sm:$0xff]
  %v243 = vld [vmem:[%s2 + $0x140] sm:$0xff]
  %v244 = vld [vmem:[%s2 + $0x148] sm:$0xff]
  %v245 = vld [vmem:[%s2 + $0x150] sm:$0xff]
  %v246 = vld [vmem:[%s2 + $0x158] sm:$0xff]
  %v247 = vld [vmem:[%s2 + $0x160] sm:$0xff]
  %v248 = vld [vmem:[%s2 + $0x168] sm:$0xff]
  %v249 = vld [vmem:[%s2 + $0x170] sm:$0xff]
  %v250 = vld [vmem:[%s2 + $0x178] sm:$0xff]
  %v251 = vld [vmem:[%s2 + $0x180] sm:$0xff]
  %v252 = vld [vmem:[%s2 + $0x188] sm:$0xff]
  %v253 = vld [vmem:[%s2 + $0x190] sm:$0xff]
  %v254 = vld [vmem:[%s2 + $0x198] sm:$0xff]
  %v255 = vld [vmem:[%s2 + $0x1a0] sm:$0xff]
  %v256 = vld [vmem:[%s2 + $0x1a8] sm:$0xff]
  %v257 = vld [vmem:[%s2 + $0x1b0] sm:$0xff]
  %v258 = vld [vmem:[%s2 + $0x1b8] sm:$0xff]
  %v259 = vld [vmem:[%s2 + $0x1c0] sm:$0xff]
  %v260 = vld [vmem:[%s2 + $0x1c8] sm:$0xff]
  %v261 = vld [vmem:[%s2 + $0x1d0] sm:$0xff]
  %v262 = vld [vmem:[%s2 + $0x1d8] sm:$0xff]
  %v263 = vld [vmem:[%s2 + $0x1e0] sm:$0xff]
  %v264 = vld [vmem:[%s2 + $0x1e8] sm:$0xff]
  %v265 = vld [vmem:[%s2 + $0x1f0] sm:$0xff]
  %v266 = vld [vmem:[%s2 + $0x1f8] sm:$0xff]
  %v267 = vld [vmem:[%s2 + $0x200] sm:$0xff]
  %v268 = vld [vmem:[%s2 + $0x208] sm:$0xff]
  %v269 = vld [vmem:[%s2 + $0x210] sm:$0xff]
  %v270 = vld [vmem:[%s2 + $0x218] sm:$0xff]
  %v271 = vld [vmem:[%s2 + $0x220] sm:$0xff]
  %v272 = vld [vmem:[%s2 + $0x228] sm:$0xff]
  %v273 = vld [vmem:[%s2 + $0x230] sm:$0xff]
  %v274 = vld [vmem:[%s2 + $0x238] sm:$0xff]
  %v275 = vld [vmem:[%s2 + $0x240] sm:$0xff]
  %v276 = vld [vmem:[%s2 + $0x248] sm:$0xff]
  %v277 = vld [vmem:[%s2 + $0x250] sm:$0xff]
  %v278 = vld [vmem:[%s2 + $0x258] sm:$0xff]
  %v279 = vld [vmem:[%s2 + $0x260] sm:$0xff]
  %v280 = vld [vmem:[%s2 + $0x268] sm:$0xff]
  %v281 = vld [vmem:[%s2 + $0x270] sm:$0xff]
  %v282 = vld [vmem:[%s2 + $0x278] sm:$0xff]
  %v283 = vld [vmem:[%s2 + $0x280] sm:$0xff]
  %v284 = vld [vmem:[%s2 + $0x288] sm:$0xff]
  %v285 = vld [vmem:[%s2 + $0x290] sm:$0xff]
  %v286 = vld [vmem:[%s2 + $0x298] sm:$0xff]
  %v329 = vunpack.c.l.b16 %v161
  %v330 = vunpack.c.h.b16 %v161
  %v331 = vunpack.c.l.b16 %v162
  %v332 = vunpack.c.h.b16 %v162
  %v333 = vunpack.c.l.b16 %v163
  %v334 = vunpack.c.h.b16 %v163
  %v335 = vunpack.c.l.b16 %v164
  %v336 = vunpack.c.h.b16 %v164
  %v337 = vunpack.c.l.b16 %v165
  %v338 = vunpack.c.h.b16 %v165
  %v339 = vunpack.c.l.b16 %v166
  %v340 = vunpack.c.h.b16 %v166
  %v341 = vunpack.c.l.b16 %v167
  %v342 = vunpack.c.h.b16 %v167
  %v343 = vunpack.c.l.b16 %v168
  %v344 = vunpack.c.h.b16 %v168
  %v345 = vunpack.c.l.b16 %v169
  %v346 = vunpack.c.h.b16 %v169
  %v347 = vunpack.c.l.b16 %v170
  %v348 = vunpack.c.h.b16 %v170
  %v349 = vunpack.c.l.b16 %v171
  %v350 = vunpack.c.h.b16 %v171
  %v351 = vunpack.c.l.b16 %v172
  %v352 = vunpack.c.h.b16 %v172
  %v353 = vunpack.c.l.b16 %v173
  %v354 = vunpack.c.h.b16 %v173
  %v355 = vunpack.c.l.b16 %v174
  %v356 = vunpack.c.h.b16 %v174
  %v357 = vunpack.c.l.b16 %v175
  %v358 = vunpack.c.h.b16 %v175
  %v359 = vunpack.c.l.b16 %v176
  %v360 = vunpack.c.h.b16 %v176
  %v361 = vunpack.c.l.b16 %v177
  %v362 = vunpack.c.h.b16 %v177
  %v363 = vunpack.c.l.b16 %v178
  %v364 = vunpack.c.h.b16 %v178
  %v365 = vunpack.c.l.b16 %v179
  %v366 = vunpack.c.h.b16 %v179
  %v367 = vunpack.c.l.b16 %v180
  %v368 = vunpack.c.h.b16 %v180
  %v369 = vunpack.c.l.b16 %v181
  %v370 = vunpack.c.h.b16 %v181
  %v371 = vunpack.c.l.b16 %v182
  %v372 = vunpack.c.h.b16 %v182
  %v373 = vunpack.c.l.b16 %v183
  %v374 = vunpack.c.h.b16 %v183
  %v375 = vunpack.c.l.b16 %v184
  %v376 = vunpack.c.h.b16 %v184
  %v377 = vunpack.c.l.b16 %v185
  %v378 = vunpack.c.h.b16 %v185
  %v379 = vunpack.c.l.b16 %v186
  %v380 = vunpack.c.h.b16 %v186
  %v381 = vunpack.c.l.b16 %v187
  %v382 = vunpack.c.h.b16 %v187
  %v383 = vunpack.c.l.b16 %v188
  %v384 = vunpack.c.h.b16 %v188
  %v385 = vunpack.c.l.b16 %v189
  %v386 = vunpack.c.h.b16 %v189
  %v387 = vunpack.c.l.b16 %v190
  %v388 = vunpack.c.h.b16 %v190
  %v389 = vunpack.c.l.b16 %v191
  %v390 = vunpack.c.h.b16 %v191
  %v391 = vunpack.c.l.b16 %v192
  %v392 = vunpack.c.h.b16 %v192
  %v393 = vunpack.c.l.b16 %v193
  %v394 = vunpack.c.h.b16 %v193
  %v395 = vunpack.c.l.b16 %v194
  %v396 = vunpack.c.h.b16 %v194
  %v397 = vunpack.c.l.b16 %v195
  %v398 = vunpack.c.h.b16 %v195
  %v399 = vunpack.c.l.b16 %v196
  %v400 = vunpack.c.h.b16 %v196
  %v401 = vunpack.c.l.b16 %v197
  %v402 = vunpack.c.h.b16 %v197
  %v403 = vunpack.c.l.b16 %v198
  %v404 = vunpack.c.h.b16 %v198
  %v405 = vunpack.c.l.b16 %v199
  %v406 = vunpack.c.h.b16 %v199
  %v407 = vunpack.c.l.b16 %v200
  %v408 = vunpack.c.h.b16 %v200
  %v409 = vunpack.c.l.b16 %v201
  %v410 = vunpack.c.h.b16 %v201
  %v411 = vunpack.c.l.b16 %v202
  %v412 = vunpack.c.h.b16 %v202
  %v413 = vpack.c.b16 %v335, %v329
  %v414 = vpack.c.b16 %v336, %v330
  %v415 = vpack.c.b16 %v337, %v331
  %v416 = vpack.c.b16 %v338, %v332
  %v417 = vpack.c.b16 %v339, %v333
  %v418 = vpack.c.b16 %v340, %v334
  %v419 = vpack.c.b16 %v347, %v341
  %v420 = vpack.c.b16 %v348, %v342
  %v421 = vpack.c.b16 %v349, %v343
  %v422 = vpack.c.b16 %v350, %v344
  %v423 = vpack.c.b16 %v351, %v345
  %v424 = vpack.c.b16 %v352, %v346
  %v425 = vpack.c.b16 %v359, %v353
  %v426 = vpack.c.b16 %v360, %v354
  %v427 = vpack.c.b16 %v361, %v355
  %v428 = vpack.c.b16 %v362, %v356
  %v429 = vpack.c.b16 %v363, %v357
  %v430 = vpack.c.b16 %v364, %v358
  %v431 = vpack.c.b16 %v371, %v365
  %v432 = vpack.c.b16 %v372, %v366
  %v433 = vpack.c.b16 %v373, %v367
  %v434 = vpack.c.b16 %v374, %v368
  %v435 = vpack.c.b16 %v375, %v369
  %v436 = vpack.c.b16 %v376, %v370
  %v437 = vpack.c.b16 %v383, %v377
  %v438 = vpack.c.b16 %v384, %v378
  %v439 = vpack.c.b16 %v385, %v379
  %v440 = vpack.c.b16 %v386, %v380
  %v441 = vpack.c.b16 %v387, %v381
  %v442 = vpack.c.b16 %v388, %v382
  %v443 = vpack.c.b16 %v395, %v389
  %v444 = vpack.c.b16 %v396, %v390
  %v445 = vpack.c.b16 %v397, %v391
  %v446 = vpack.c.b16 %v398, %v392
  %v447 = vpack.c.b16 %v399, %v393
  %v448 = vpack.c.b16 %v400, %v394
  %v449 = vpack.c.b16 %v407, %v401
  %v450 = vpack.c.b16 %v408, %v402
  %v451 = vpack.c.b16 %v409, %v403
  %v452 = vpack.c.b16 %v410, %v404
  %v453 = vpack.c.b16 %v411, %v405
  %v454 = vpack.c.b16 %v412, %v406
  %v574 = vunpack.c.l.b16 %v203
  %v575 = vunpack.c.h.b16 %v203
  %v576 = vunpack.c.l.b16 %v204
  %v577 = vunpack.c.h.b16 %v204
  %v578 = vunpack.c.l.b16 %v205
  %v579 = vunpack.c.h.b16 %v205
  %v580 = vunpack.c.l.b16 %v206
  %v581 = vunpack.c.h.b16 %v206
  %v582 = vunpack.c.l.b16 %v207
  %v583 = vunpack.c.h.b16 %v207
  %v584 = vunpack.c.l.b16 %v208
  %v585 = vunpack.c.h.b16 %v208
  %v586 = vunpack.c.l.b16 %v209
  %v587 = vunpack.c.h.b16 %v209
  %v588 = vunpack.c.l.b16 %v210
  %v589 = vunpack.c.h.b16 %v210
  %v590 = vunpack.c.l.b16 %v211
  %v591 = vunpack.c.h.b16 %v211
  %v592 = vunpack.c.l.b16 %v212
  %v593 = vunpack.c.h.b16 %v212
  %v594 = vunpack.c.l.b16 %v213
  %v595 = vunpack.c.h.b16 %v213
  %v596 = vunpack.c.l.b16 %v214
  %v597 = vunpack.c.h.b16 %v214
  %v598 = vunpack.c.l.b16 %v215
  %v599 = vunpack.c.h.b16 %v215
  %v600 = vunpack.c.l.b16 %v216
  %v601 = vunpack.c.h.b16 %v216
  %v602 = vunpack.c.l.b16 %v217
  %v603 = vunpack.c.h.b16 %v217
  %v604 = vunpack.c.l.b16 %v218
  %v605 = vunpack.c.h.b16 %v218
  %v606 = vunpack.c.l.b16 %v219
  %v607 = vunpack.c.h.b16 %v219
  %v608 = vunpack.c.l.b16 %v220
  %v609 = vunpack.c.h.b16 %v220
  %v610 = vunpack.c.l.b16 %v221
  %v611 = vunpack.c.h.b16 %v221
  %v612 = vunpack.c.l.b16 %v222
  %v613 = vunpack.c.h.b16 %v222
  %v614 = vunpack.c.l.b16 %v223
  %v615 = vunpack.c.h.b16 %v223
  %v616 = vunpack.c.l.b16 %v224
  %v617 = vunpack.c.h.b16 %v224
  %v618 = vunpack.c.l.b16 %v225
  %v619 = vunpack.c.h.b16 %v225
  %v620 = vunpack.c.l.b16 %v226
  %v621 = vunpack.c.h.b16 %v226
  %v622 = vunpack.c.l.b16 %v227
  %v623 = vunpack.c.h.b16 %v227
  %v624 = vunpack.c.l.b16 %v228
  %v625 = vunpack.c.h.b16 %v228
  %v626 = vunpack.c.l.b16 %v229
  %v627 = vunpack.c.h.b16 %v229
  %v628 = vunpack.c.l.b16 %v230
  %v629 = vunpack.c.h.b16 %v230
  %v630 = vunpack.c.l.b16 %v231
  %v631 = vunpack.c.h.b16 %v231
  %v632 = vunpack.c.l.b16 %v232
  %v633 = vunpack.c.h.b16 %v232
  %v634 = vunpack.c.l.b16 %v233
  %v635 = vunpack.c.h.b16 %v233
  %v636 = vunpack.c.l.b16 %v234
  %v637 = vunpack.c.h.b16 %v234
  %v638 = vunpack.c.l.b16 %v235
  %v639 = vunpack.c.h.b16 %v235
  %v640 = vunpack.c.l.b16 %v236
  %v641 = vunpack.c.h.b16 %v236
  %v642 = vunpack.c.l.b16 %v237
  %v643 = vunpack.c.h.b16 %v237
  %v644 = vunpack.c.l.b16 %v238
  %v645 = vunpack.c.h.b16 %v238
  %v646 = vunpack.c.l.b16 %v239
  %v647 = vunpack.c.h.b16 %v239
  %v648 = vunpack.c.l.b16 %v240
  %v649 = vunpack.c.h.b16 %v240
  %v650 = vunpack.c.l.b16 %v241
  %v651 = vunpack.c.h.b16 %v241
  %v652 = vunpack.c.l.b16 %v242
  %v653 = vunpack.c.h.b16 %v242
  %v654 = vunpack.c.l.b16 %v243
  %v655 = vunpack.c.h.b16 %v243
  %v656 = vunpack.c.l.b16 %v244
  %v657 = vunpack.c.h.b16 %v244
  %v658 = vunpack.c.l.b16 %v245
  %v659 = vunpack.c.h.b16 %v245
  %v660 = vunpack.c.l.b16 %v246
  %v661 = vunpack.c.h.b16 %v246
  %v662 = vunpack.c.l.b16 %v247
  %v663 = vunpack.c.h.b16 %v247
  %v664 = vunpack.c.l.b16 %v248
  %v665 = vunpack.c.h.b16 %v248
  %v666 = vunpack.c.l.b16 %v249
  %v667 = vunpack.c.h.b16 %v249
  %v668 = vunpack.c.l.b16 %v250
  %v669 = vunpack.c.h.b16 %v250
  %v670 = vunpack.c.l.b16 %v251
  %v671 = vunpack.c.h.b16 %v251
  %v672 = vunpack.c.l.b16 %v252
  %v673 = vunpack.c.h.b16 %v252
  %v674 = vunpack.c.l.b16 %v253
  %v675 = vunpack.c.h.b16 %v253
  %v676 = vunpack.c.l.b16 %v254
  %v677 = vunpack.c.h.b16 %v254
  %v678 = vunpack.c.l.b16 %v255
  %v679 = vunpack.c.h.b16 %v255
  %v680 = vunpack.c.l.b16 %v256
  %v681 = vunpack.c.h.b16 %v256
  %v682 = vunpack.c.l.b16 %v257
  %v683 = vunpack.c.h.b16 %v257
  %v684 = vunpack.c.l.b16 %v258
  %v685 = vunpack.c.h.b16 %v258
  %v686 = vunpack.c.l.b16 %v259
  %v687 = vunpack.c.h.b16 %v259
  %v688 = vunpack.c.l.b16 %v260
  %v689 = vunpack.c.h.b16 %v260
  %v690 = vunpack.c.l.b16 %v261
  %v691 = vunpack.c.h.b16 %v261
  %v692 = vunpack.c.l.b16 %v262
  %v693 = vunpack.c.h.b16 %v262
  %v694 = vunpack.c.l.b16 %v263
  %v695 = vunpack.c.h.b16 %v263
  %v696 = vunpack.c.l.b16 %v264
  %v697 = vunpack.c.h.b16 %v264
  %v698 = vunpack.c.l.b16 %v265
  %v699 = vunpack.c.h.b16 %v265
  %v700 = vunpack.c.l.b16 %v266
  %v701 = vunpack.c.h.b16 %v266
  %v702 = vunpack.c.l.b16 %v267
  %v703 = vunpack.c.h.b16 %v267
  %v704 = vunpack.c.l.b16 %v268
  %v705 = vunpack.c.h.b16 %v268
  %v706 = vunpack.c.l.b16 %v269
  %v707 = vunpack.c.h.b16 %v269
  %v708 = vunpack.c.l.b16 %v270
  %v709 = vunpack.c.h.b16 %v270
  %v710 = vunpack.c.l.b16 %v271
  %v711 = vunpack.c.h.b16 %v271
  %v712 = vunpack.c.l.b16 %v272
  %v713 = vunpack.c.h.b16 %v272
  %v714 = vunpack.c.l.b16 %v273
  %v715 = vunpack.c.h.b16 %v273
  %v716 = vunpack.c.l.b16 %v274
  %v717 = vunpack.c.h.b16 %v274
  %v718 = vunpack.c.l.b16 %v275
  %v719 = vunpack.c.h.b16 %v275
  %v720 = vunpack.c.l.b16 %v276
  %v721 = vunpack.c.h.b16 %v276
  %v722 = vunpack.c.l.b16 %v277
  %v723 = vunpack.c.h.b16 %v277
  %v724 = vunpack.c.l.b16 %v278
  %v725 = vunpack.c.h.b16 %v278
  %v726 = vunpack.c.l.b16 %v279
  %v727 = vunpack.c.h.b16 %v279
  %v728 = vunpack.c.l.b16 %v280
  %v729 = vunpack.c.h.b16 %v280
  %v730 = vunpack.c.l.b16 %v281
  %v731 = vunpack.c.h.b16 %v281
  %v732 = vunpack.c.l.b16 %v282
  %v733 = vunpack.c.h.b16 %v282
  %v734 = vunpack.c.l.b16 %v283
  %v735 = vunpack.c.h.b16 %v283
  %v736 = vunpack.c.l.b16 %v284
  %v737 = vunpack.c.h.b16 %v284
  %v738 = vunpack.c.l.b16 %v285
  %v739 = vunpack.c.h.b16 %v285
  %v740 = vunpack.c.l.b16 %v286
  %v741 = vunpack.c.h.b16 %v286
  %v742 = vpack.c.b16 %v576, %v574
  %v743 = vpack.c.b16 %v577, %v575
  %v744 = vpack.c.b16 %v580, %v578
  %v745 = vpack.c.b16 %v581, %v579
  %v746 = vpack.c.b16 %v584, %v582
  %v747 = vpack.c.b16 %v585, %v583
  %v748 = vpack.c.b16 %v588, %v586
  %v749 = vpack.c.b16 %v589, %v587
  %v750 = vpack.c.b16 %v592, %v590
  %v751 = vpack.c.b16 %v593, %v591
  %v752 = vpack.c.b16 %v596, %v594
  %v753 = vpack.c.b16 %v597, %v595
  %v754 = vpack.c.b16 %v600, %v598
  %v755 = vpack.c.b16 %v601, %v599
  %v756 = vpack.c.b16 %v604, %v602
  %v757 = vpack.c.b16 %v605, %v603
  %v758 = vpack.c.b16 %v608, %v606
  %v759 = vpack.c.b16 %v609, %v607
  %v760 = vpack.c.b16 %v612, %v610
  %v761 = vpack.c.b16 %v613, %v611
  %v762 = vpack.c.b16 %v616, %v614
  %v763 = vpack.c.b16 %v617, %v615
  %v764 = vpack.c.b16 %v620, %v618
  %v765 = vpack.c.b16 %v621, %v619
  %v766 = vpack.c.b16 %v624, %v622
  %v767 = vpack.c.b16 %v625, %v623
  %v768 = vpack.c.b16 %v628, %v626
  %v769 = vpack.c.b16 %v629, %v627
  %v770 = vpack.c.b16 %v632, %v630
  %v771 = vpack.c.b16 %v633, %v631
  %v772 = vpack.c.b16 %v636, %v634
  %v773 = vpack.c.b16 %v637, %v635
  %v774 = vpack.c.b16 %v640, %v638
  %v775 = vpack.c.b16 %v641, %v639
  %v776 = vpack.c.b16 %v644, %v642
  %v777 = vpack.c.b16 %v645, %v643
  %v778 = vpack.c.b16 %v648, %v646
  %v779 = vpack.c.b16 %v649, %v647
  %v780 = vpack.c.b16 %v652, %v650
  %v781 = vpack.c.b16 %v653, %v651
  %v782 = vpack.c.b16 %v656, %v654
  %v783 = vpack.c.b16 %v657, %v655
  %v784 = vpack.c.b16 %v660, %v658
  %v785 = vpack.c.b16 %v661, %v659
  %v786 = vpack.c.b16 %v664, %v662
  %v787 = vpack.c.b16 %v665, %v663
  %v788 = vpack.c.b16 %v668, %v666
  %v789 = vpack.c.b16 %v669, %v667
  %v790 = vpack.c.b16 %v672, %v670
  %v791 = vpack.c.b16 %v673, %v671
  %v792 = vpack.c.b16 %v676, %v674
  %v793 = vpack.c.b16 %v677, %v675
  %v794 = vpack.c.b16 %v680, %v678
  %v795 = vpack.c.b16 %v681, %v679
  %v796 = vpack.c.b16 %v684, %v682
  %v797 = vpack.c.b16 %v685, %v683
  %v798 = vpack.c.b16 %v688, %v686
  %v799 = vpack.c.b16 %v689, %v687
  %v800 = vpack.c.b16 %v692, %v690
  %v801 = vpack.c.b16 %v693, %v691
  %v802 = vpack.c.b16 %v696, %v694
  %v803 = vpack.c.b16 %v697, %v695
  %v804 = vpack.c.b16 %v700, %v698
  %v805 = vpack.c.b16 %v701, %v699
  %v806 = vpack.c.b16 %v704, %v702
  %v807 = vpack.c.b16 %v705, %v703
  %v808 = vpack.c.b16 %v708, %v706
  %v809 = vpack.c.b16 %v709, %v707
  %v810 = vpack.c.b16 %v712, %v710
  %v811 = vpack.c.b16 %v713, %v711
  %v812 = vpack.c.b16 %v716, %v714
  %v813 = vpack.c.b16 %v717, %v715
  %v814 = vpack.c.b16 %v720, %v718
  %v815 = vpack.c.b16 %v721, %v719
  %v816 = vpack.c.b16 %v724, %v722
  %v817 = vpack.c.b16 %v725, %v723
  %v818 = vpack.c.b16 %v728, %v726
  %v819 = vpack.c.b16 %v729, %v727
  %v820 = vpack.c.b16 %v732, %v730
  %v821 = vpack.c.b16 %v733, %v731
  %v822 = vpack.c.b16 %v736, %v734
  %v823 = vpack.c.b16 %v737, %v735
  %v824 = vpack.c.b16 %v740, %v738
  %v825 = vpack.c.b16 %v741, %v739
  %vm910 = vcmask 261120
  %v912 = vsel %vm910, %v418, 0
  %v915 = vsel %vm910, %v424, 0
  %v918 = vsel %vm910, %v430, 0
  %v921 = vsel %vm910, %v436, 0
  %v924 = vsel %vm910, %v442, 0
  %v927 = vsel %vm910, %v448, 0
  %v930 = vsel %vm910, %v454, 0
  %932 = vmatprep.subr.bf16.mxu0 %v757
  %933 = vmatpush1.bf16.msra.mxu0 %v756
  %934 = vmatprep.subr.bf16.mxu0 %v755
  %935 = vmatpush1.bf16.msra.mxu0 %v754
  %936 = vmatprep.subr.bf16.mxu0 %v753
  %937 = vmatpush1.bf16.msra.mxu0 %v752
  %938 = vmatprep.subr.bf16.mxu0 %v751
  %939 = vmatpush1.bf16.msra.mxu0 %v750
  %940 = vmatprep.subr.bf16.mxu0 %v749
  %941 = vmatpush1.bf16.msra.mxu0 %v748
  %942 = vmatprep.subr.bf16.mxu0 %v747
  %943 = vmatpush1.bf16.msra.mxu0 %v746
  %944 = vmatprep.subr.bf16.mxu0 %v745
  %945 = vmatpush1.bf16.msra.mxu0 %v744
  %946 = vmatprep.subr.bf16.mxu0 %v743
  %947 = vmatpush1.bf16.msra.mxu0 %v742
  %948 = vmatprep.subr.bf16.mxu0 %v773
  %949 = vmatpush2.bf16.msra.mxu0 %v772
  %950 = vmatprep.subr.bf16.mxu0 %v771
  %951 = vmatpush2.bf16.msra.mxu0 %v770
  %952 = vmatprep.subr.bf16.mxu0 %v769
  %953 = vmatpush2.bf16.msra.mxu0 %v768
  %954 = vmatprep.subr.bf16.mxu0 %v767
  %955 = vmatpush2.bf16.msra.mxu0 %v766
  %956 = vmatprep.subr.bf16.mxu0 %v765
  %957 = vmatpush2.bf16.msra.mxu0 %v764
  %958 = vmatprep.subr.bf16.mxu0 %v763
  %959 = vmatpush2.bf16.msra.mxu0 %v762
  %960 = vmatprep.subr.bf16.mxu0 %v761
  %961 = vmatpush2.bf16.msra.mxu0 %v760
  %962 = vmatprep.subr.bf16.mxu0 %v759
  %963 = vmatpush2.bf16.msra.mxu0 %v758
  %964 = vmatprep.mubr.bf16.mxu0 %v414
  %965 = vmatmul.mubr.bf16.gmra.mxu0 %v413
  %v966 = vpop.f32.mrf.mxu0
  %v967 = vadd.f32 0.0, %v966
  %v968 = vpop.f32.mrf.mxu0
  %v969 = vadd.f32 0.0, %v968
  %v970 = vpop.f32.mrf.mxu0
  %v971 = vadd.f32 0.0, %v970
  %v972 = vpop.f32.mrf.mxu0
  %v973 = vadd.f32 0.0, %v972
  %974 = vmatprep.mubr.bf16.mxu0 %v420
  %975 = vmatmul.mubr.bf16.gmra.mxu0 %v419
  %v976 = vpop.f32.mrf.mxu0
  %v977 = vadd.f32 0.0, %v976
  %v978 = vpop.f32.mrf.mxu0
  %v979 = vadd.f32 0.0, %v978
  %v980 = vpop.f32.mrf.mxu0
  %v981 = vadd.f32 0.0, %v980
  %v982 = vpop.f32.mrf.mxu0
  %v983 = vadd.f32 0.0, %v982
  %984 = vmatprep.mubr.bf16.mxu0 %v426
  %985 = vmatmul.mubr.bf16.gmra.mxu0 %v425
  %v986 = vpop.f32.mrf.mxu0
  %v987 = vadd.f32 0.0, %v986
  %v988 = vpop.f32.mrf.mxu0
  %v989 = vadd.f32 0.0, %v988
  %v990 = vpop.f32.mrf.mxu0
  %v991 = vadd.f32 0.0, %v990
  %v992 = vpop.f32.mrf.mxu0
  %v993 = vadd.f32 0.0, %v992
  %994 = vmatprep.mubr.bf16.mxu0 %v432
  %995 = vmatmul.mubr.bf16.gmra.mxu0 %v431
  %v996 = vpop.f32.mrf.mxu0
  %v997 = vadd.f32 0.0, %v996
  %v998 = vpop.f32.mrf.mxu0
  %v999 = vadd.f32 0.0, %v998
  %v1000 = vpop.f32.mrf.mxu0
  %v1001 = vadd.f32 0.0, %v1000
  %v1002 = vpop.f32.mrf.mxu0
  %v1003 = vadd.f32 0.0, %v1002
  %1004 = vmatprep.mubr.bf16.mxu0 %v438
  %1005 = vmatmul.mubr.bf16.gmra.mxu0 %v437
  %v1006 = vpop.f32.mrf.mxu0
  %v1007 = vadd.f32 0.0, %v1006
  %v1008 = vpop.f32.mrf.mxu0
  %v1009 = vadd.f32 0.0, %v1008
  %v1010 = vpop.f32.mrf.mxu0
  %v1011 = vadd.f32 0.0, %v1010
  %v1012 = vpop.f32.mrf.mxu0
  %v1013 = vadd.f32 0.0, %v1012
  %1014 = vmatprep.mubr.bf16.mxu0 %v444
  %1015 = vmatmul.mubr.bf16.gmra.mxu0 %v443
  %v1016 = vpop.f32.mrf.mxu0
  %v1017 = vadd.f32 0.0, %v1016
  %v1018 = vpop.f32.mrf.mxu0
  %v1019 = vadd.f32 0.0, %v1018
  %v1020 = vpop.f32.mrf.mxu0
  %v1021 = vadd.f32 0.0, %v1020
  %v1022 = vpop.f32.mrf.mxu0
  %v1023 = vadd.f32 0.0, %v1022
  %1024 = vmatprep.mubr.bf16.mxu0 %v450
  %1025 = vmatmul.mubr.bf16.gmra.mxu0 %v449
  %v1026 = vpop.f32.mrf.mxu0
  %v1027 = vadd.f32 0.0, %v1026
  %v1028 = vpop.f32.mrf.mxu0
  %v1029 = vadd.f32 0.0, %v1028
  %v1030 = vpop.f32.mrf.mxu0
  %v1031 = vadd.f32 0.0, %v1030
  %v1032 = vpop.f32.mrf.mxu0
  %v1033 = vadd.f32 0.0, %v1032
  %1034 = vdwg.mxu0
  %1035 = vmatprep.subr.bf16.mxu0 %v789
  %1036 = vmatpush1.bf16.msra.mxu0 %v788
  %1037 = vmatprep.subr.bf16.mxu0 %v787
  %1038 = vmatpush1.bf16.msra.mxu0 %v786
  %1039 = vmatprep.subr.bf16.mxu0 %v785
  %1040 = vmatpush1.bf16.msra.mxu0 %v784
  %1041 = vmatprep.subr.bf16.mxu0 %v783
  %1042 = vmatpush1.bf16.msra.mxu0 %v782
  %1043 = vmatprep.subr.bf16.mxu0 %v781
  %1044 = vmatpush1.bf16.msra.mxu0 %v780
  %1045 = vmatprep.subr.bf16.mxu0 %v779
  %1046 = vmatpush1.bf16.msra.mxu0 %v778
  %1047 = vmatprep.subr.bf16.mxu0 %v777
  %1048 = vmatpush1.bf16.msra.mxu0 %v776
  %1049 = vmatprep.subr.bf16.mxu0 %v775
  %1050 = vmatpush1.bf16.msra.mxu0 %v774
  %1051 = vmatprep.subr.bf16.mxu0 %v805
  %1052 = vmatpush2.bf16.msra.mxu0 %v804
  %1053 = vmatprep.subr.bf16.mxu0 %v803
  %1054 = vmatpush2.bf16.msra.mxu0 %v802
  %1055 = vmatprep.subr.bf16.mxu0 %v801
  %1056 = vmatpush2.bf16.msra.mxu0 %v800
  %1057 = vmatprep.subr.bf16.mxu0 %v799
  %1058 = vmatpush2.bf16.msra.mxu0 %v798
  %1059 = vmatprep.subr.bf16.mxu0 %v797
  %1060 = vmatpush2.bf16.msra.mxu0 %v796
  %1061 = vmatprep.subr.bf16.mxu0 %v795
  %1062 = vmatpush2.bf16.msra.mxu0 %v794
  %1063 = vmatprep.subr.bf16.mxu0 %v793
  %1064 = vmatpush2.bf16.msra.mxu0 %v792
  %1065 = vmatprep.subr.bf16.mxu0 %v791
  %1066 = vmatpush2.bf16.msra.mxu0 %v790
  %1067 = vmatprep.mubr.bf16.mxu0 %v416
  %1068 = vmatmul.mubr.bf16.gmra.mxu0 %v415
  %v1069 = vpop.f32.mrf.mxu0
  %v1070 = vadd.f32 %v967, %v1069
  %v1071 = vpop.f32.mrf.mxu0
  %v1072 = vadd.f32 %v969, %v1071
  %v1073 = vpop.f32.mrf.mxu0
  %v1074 = vadd.f32 %v971, %v1073
  %v1075 = vpop.f32.mrf.mxu0
  %v1076 = vadd.f32 %v973, %v1075
  %1077 = vmatprep.mubr.bf16.mxu0 %v422
  %1078 = vmatmul.mubr.bf16.gmra.mxu0 %v421
  %v1079 = vpop.f32.mrf.mxu0
  %v1080 = vadd.f32 %v977, %v1079
  %v1081 = vpop.f32.mrf.mxu0
  %v1082 = vadd.f32 %v979, %v1081
  %v1083 = vpop.f32.mrf.mxu0
  %v1084 = vadd.f32 %v981, %v1083
  %v1085 = vpop.f32.mrf.mxu0
  %v1086 = vadd.f32 %v983, %v1085
  %1087 = vmatprep.mubr.bf16.mxu0 %v428
  %1088 = vmatmul.mubr.bf16.gmra.mxu0 %v427
  %v1089 = vpop.f32.mrf.mxu0
  %v1090 = vadd.f32 %v987, %v1089
  %v1091 = vpop.f32.mrf.mxu0
  %v1092 = vadd.f32 %v989, %v1091
  %v1093 = vpop.f32.mrf.mxu0
  %v1094 = vadd.f32 %v991, %v1093
  %v1095 = vpop.f32.mrf.mxu0
  %v1096 = vadd.f32 %v993, %v1095
  %1097 = vmatprep.mubr.bf16.mxu0 %v434
  %1098 = vmatmul.mubr.bf16.gmra.mxu0 %v433
  %v1099 = vpop.f32.mrf.mxu0
  %v1100 = vadd.f32 %v997, %v1099
  %v1101 = vpop.f32.mrf.mxu0
  %v1102 = vadd.f32 %v999, %v1101
  %v1103 = vpop.f32.mrf.mxu0
  %v1104 = vadd.f32 %v1001, %v1103
  %v1105 = vpop.f32.mrf.mxu0
  %v1106 = vadd.f32 %v1003, %v1105
  %1107 = vmatprep.mubr.bf16.mxu0 %v440
  %1108 = vmatmul.mubr.bf16.gmra.mxu0 %v439
  %v1109 = vpop.f32.mrf.mxu0
  %v1110 = vadd.f32 %v1007, %v1109
  %v1111 = vpop.f32.mrf.mxu0
  %v1112 = vadd.f32 %v1009, %v1111
  %v1113 = vpop.f32.mrf.mxu0
  %v1114 = vadd.f32 %v1011, %v1113
  %v1115 = vpop.f32.mrf.mxu0
  %v1116 = vadd.f32 %v1013, %v1115
  %1117 = vmatprep.mubr.bf16.mxu0 %v446
  %1118 = vmatmul.mubr.bf16.gmra.mxu0 %v445
  %v1119 = vpop.f32.mrf.mxu0
  %v1120 = vadd.f32 %v1017, %v1119
  %v1121 = vpop.f32.mrf.mxu0
  %v1122 = vadd.f32 %v1019, %v1121
  %v1123 = vpop.f32.mrf.mxu0
  %v1124 = vadd.f32 %v1021, %v1123
  %v1125 = vpop.f32.mrf.mxu0
  %v1126 = vadd.f32 %v1023, %v1125
  %1127 = vmatprep.mubr.bf16.mxu0 %v452
  %1128 = vmatmul.mubr.bf16.gmra.mxu0 %v451
  %v1129 = vpop.f32.mrf.mxu0
  %v1130 = vadd.f32 %v1027, %v1129
  %v1131 = vpop.f32.mrf.mxu0
  %v1132 = vadd.f32 %v1029, %v1131
  %v1133 = vpop.f32.mrf.mxu0
  %v1134 = vadd.f32 %v1031, %v1133
  %v1135 = vpop.f32.mrf.mxu0
  %v1136 = vadd.f32 %v1033, %v1135
  %1137 = vdwg.mxu0
  %1138 = vmatprep.subr.bf16.mxu0 %v821
  %1139 = vmatpush1.bf16.msra.mxu0 %v820
  %1140 = vmatprep.subr.bf16.mxu0 %v819
  %1141 = vmatpush1.bf16.msra.mxu0 %v818
  %1142 = vmatprep.subr.bf16.mxu0 %v817
  %1143 = vmatpush1.bf16.msra.mxu0 %v816
  %1144 = vmatprep.subr.bf16.mxu0 %v815
  %1145 = vmatpush1.bf16.msra.mxu0 %v814
  %1146 = vmatprep.subr.bf16.mxu0 %v813
  %1147 = vmatpush1.bf16.msra.mxu0 %v812
  %1148 = vmatprep.subr.bf16.mxu0 %v811
  %1149 = vmatpush1.bf16.msra.mxu0 %v810
  %1150 = vmatprep.subr.bf16.mxu0 %v809
  %1151 = vmatpush1.bf16.msra.mxu0 %v808
  %1152 = vmatprep.subr.bf16.mxu0 %v807
  %1153 = vmatpush1.bf16.msra.mxu0 %v806
  %1154 = vmatprep.subr.bf16.mxu0 0
  %1155 = vmatpush2.bf16.msra.mxu0 0
  %1156 = vmatprep.subr.bf16.mxu0 0
  %1157 = vmatpush2.bf16.msra.mxu0 0
  %1158 = vmatprep.subr.bf16.mxu0 0
  %1159 = vmatpush2.bf16.msra.mxu0 0
  %1160 = vmatprep.subr.bf16.mxu0 0
  %1161 = vmatpush2.bf16.msra.mxu0 0
  %1162 = vmatprep.subr.bf16.mxu0 0
  %1163 = vmatpush2.bf16.msra.mxu0 0
  %1164 = vmatprep.subr.bf16.mxu0 0
  %1165 = vmatpush2.bf16.msra.mxu0 0
  %1166 = vmatprep.subr.bf16.mxu0 %v825
  %1167 = vmatpush2.bf16.msra.mxu0 %v824
  %1168 = vmatprep.subr.bf16.mxu0 %v823
  %1169 = vmatpush2.bf16.msra.mxu0 %v822
  %1170 = vmatprep.mubr.bf16.mxu0 %v912
  %1171 = vmatmul.mubr.bf16.gmra.mxu0 %v417
  %v1172 = vpop.f32.mrf.mxu0
  %v1173 = vadd.f32 %v1070, %v1172
  %v1174 = vpop.f32.mrf.mxu0
  %v1175 = vadd.f32 %v1072, %v1174
  %v1176 = vpop.f32.mrf.mxu0
  %v1177 = vadd.f32 %v1074, %v1176
  %v1178 = vpop.f32.mrf.mxu0
  %v1179 = vadd.f32 %v1076, %v1178
  %1180 = vmatprep.mubr.bf16.mxu0 %v915
  %1181 = vmatmul.mubr.bf16.gmra.mxu0 %v423
  %v1182 = vpop.f32.mrf.mxu0
  %v1183 = vadd.f32 %v1080, %v1182
  %v1184 = vpop.f32.mrf.mxu0
  %v1185 = vadd.f32 %v1082, %v1184
  %v1186 = vpop.f32.mrf.mxu0
  %v1187 = vadd.f32 %v1084, %v1186
  %v1188 = vpop.f32.mrf.mxu0
  %v1189 = vadd.f32 %v1086, %v1188
  %1190 = vmatprep.mubr.bf16.mxu0 %v918
  %1191 = vmatmul.mubr.bf16.gmra.mxu0 %v429
  %v1192 = vpop.f32.mrf.mxu0
  %v1193 = vadd.f32 %v1090, %v1192
  %v1194 = vpop.f32.mrf.mxu0
  %v1195 = vadd.f32 %v1092, %v1194
  %v1196 = vpop.f32.mrf.mxu0
  %v1197 = vadd.f32 %v1094, %v1196
  %v1198 = vpop.f32.mrf.mxu0
  %v1199 = vadd.f32 %v1096, %v1198
  %1200 = vmatprep.mubr.bf16.mxu0 %v921
  %1201 = vmatmul.mubr.bf16.gmra.mxu0 %v435
  %v1202 = vpop.f32.mrf.mxu0
  %v1203 = vadd.f32 %v1100, %v1202
  %v1204 = vpop.f32.mrf.mxu0
  %v1205 = vadd.f32 %v1102, %v1204
  %v1206 = vpop.f32.mrf.mxu0
  %v1207 = vadd.f32 %v1104, %v1206
  %v1208 = vpop.f32.mrf.mxu0
  %v1209 = vadd.f32 %v1106, %v1208
  %1210 = vmatprep.mubr.bf16.mxu0 %v924
  %1211 = vmatmul.mubr.bf16.gmra.mxu0 %v441
  %v1212 = vpop.f32.mrf.mxu0
  %v1213 = vadd.f32 %v1110, %v1212
  %v1214 = vpop.f32.mrf.mxu0
  %v1215 = vadd.f32 %v1112, %v1214
  %v1216 = vpop.f32.mrf.mxu0
  %v1217 = vadd.f32 %v1114, %v1216
  %v1218 = vpop.f32.mrf.mxu0
  %v1219 = vadd.f32 %v1116, %v1218
  %1220 = vmatprep.mubr.bf16.mxu0 %v927
  %1221 = vmatmul.mubr.bf16.gmra.mxu0 %v447
  %v1222 = vpop.f32.mrf.mxu0
  %v1223 = vadd.f32 %v1120, %v1222
  %v1224 = vpop.f32.mrf.mxu0
  %v1225 = vadd.f32 %v1122, %v1224
  %v1226 = vpop.f32.mrf.mxu0
  %v1227 = vadd.f32 %v1124, %v1226
  %v1228 = vpop.f32.mrf.mxu0
  %v1229 = vadd.f32 %v1126, %v1228
  %1230 = vmatprep.mubr.bf16.mxu0 %v930
  %1231 = vmatmul.mubr.bf16.gmra.mxu0 %v453
  %v1232 = vpop.f32.mrf.mxu0
  %v1233 = vadd.f32 %v1130, %v1232
  %v1234 = vpop.f32.mrf.mxu0
  %v1235 = vadd.f32 %v1132, %v1234
  %v1236 = vpop.f32.mrf.mxu0
  %v1237 = vadd.f32 %v1134, %v1236
  %v1238 = vpop.f32.mrf.mxu0
  %v1239 = vadd.f32 %v1136, %v1238
  %1240 = vdwg.mxu0
  %v1241 = vpack.c.bf16 %v1177, %v1173
  %v1242 = vpack.c.bf16 %v1179, %v1175
  %v1243 = vpack.c.bf16 %v1187, %v1183
  %v1244 = vpack.c.bf16 %v1189, %v1185
  %v1245 = vpack.c.bf16 %v1197, %v1193
  %v1246 = vpack.c.bf16 %v1199, %v1195
  %v1247 = vpack.c.bf16 %v1207, %v1203
  %v1248 = vpack.c.bf16 %v1209, %v1205
  %v1249 = vpack.c.bf16 %v1217, %v1213
  %v1250 = vpack.c.bf16 %v1219, %v1215
  %v1251 = vpack.c.bf16 %v1227, %v1223
  %v1252 = vpack.c.bf16 %v1229, %v1225
  %v1253 = vpack.c.bf16 %v1237, %v1233
  %v1254 = vpack.c.bf16 %v1239, %v1235
  %v1269 = vunpack.c.l.b16 %v1241
  %v1270 = vunpack.c.l.b16 %v1242
  %v1271 = vunpack.c.h.b16 %v1241
  %v1272 = vunpack.c.h.b16 %v1242
  %v1273 = vunpack.c.l.b16 %v1243
  %v1274 = vunpack.c.l.b16 %v1244
  %v1275 = vunpack.c.h.b16 %v1243
  %v1276 = vunpack.c.h.b16 %v1244
  %v1277 = vunpack.c.l.b16 %v1245
  %v1278 = vunpack.c.l.b16 %v1246
  %v1279 = vunpack.c.h.b16 %v1245
  %v1280 = vunpack.c.h.b16 %v1246
  %v1281 = vunpack.c.l.b16 %v1247
  %v1282 = vunpack.c.l.b16 %v1248
  %v1283 = vunpack.c.h.b16 %v1247
  %v1284 = vunpack.c.h.b16 %v1248
  %v1285 = vunpack.c.l.b16 %v1249
  %v1286 = vunpack.c.l.b16 %v1250
  %v1287 = vunpack.c.h.b16 %v1249
  %v1288 = vunpack.c.h.b16 %v1250
  %v1289 = vunpack.c.l.b16 %v1251
  %v1290 = vunpack.c.l.b16 %v1252
  %v1291 = vunpack.c.h.b16 %v1251
  %v1292 = vunpack.c.h.b16 %v1252
  %v1293 = vunpack.c.l.b16 %v1253
  %v1294 = vunpack.c.l.b16 %v1254
  %v1295 = vunpack.c.h.b16 %v1253
  %v1296 = vunpack.c.h.b16 %v1254
  %v1297 = vpack.c.b16 %v1270, %v1269
  %v1298 = vpack.c.b16 %v1272, %v1271
  %v1299 = vpack.c.b16 %v1274, %v1273
  %v1300 = vpack.c.b16 %v1276, %v1275
  %v1301 = vpack.c.b16 %v1278, %v1277
  %v1302 = vpack.c.b16 %v1280, %v1279
  %v1303 = vpack.c.b16 %v1282, %v1281
  %v1304 = vpack.c.b16 %v1284, %v1283
  %v1305 = vpack.c.b16 %v1286, %v1285
  %v1306 = vpack.c.b16 %v1288, %v1287
  %v1307 = vpack.c.b16 %v1290, %v1289
  %v1308 = vpack.c.b16 %v1292, %v1291
  %v1309 = vpack.c.b16 %v1294, %v1293
  %v1310 = vpack.c.b16 %v1296, %v1295
  %vm1325 = vcmask 1043456
  %vm1326 = vcmask 556036
  %vm1327 = vmor %vm1326, %vm1325
  %1328 = vst.msk [vmem:[%s3] sm:$0xff] %vm1327, %v1297
  %1329 = vst.msk [vmem:[%s3 + $0x8] sm:$0xff] %vm1327, %v1298
  %1330 = vst.msk [vmem:[%s3 + $0x10] sm:$0xff] %vm1327, %v1299
  %1331 = vst.msk [vmem:[%s3 + $0x18] sm:$0xff] %vm1327, %v1300
  %1332 = vst.msk [vmem:[%s3 + $0x20] sm:$0xff] %vm1327, %v1301
  %1333 = vst.msk [vmem:[%s3 + $0x28] sm:$0xff] %vm1327, %v1302
  %1334 = vst.msk [vmem:[%s3 + $0x30] sm:$0xff] %vm1327, %v1303
  %1335 = vst.msk [vmem:[%s3 + $0x38] sm:$0xff] %vm1327, %v1304
  %1336 = vst.msk [vmem:[%s3 + $0x40] sm:$0xff] %vm1327, %v1305
  %1337 = vst.msk [vmem:[%s3 + $0x48] sm:$0xff] %vm1327, %v1306
  %1338 = vst.msk [vmem:[%s3 + $0x50] sm:$0xff] %vm1327, %v1307
  %1339 = vst.msk [vmem:[%s3 + $0x58] sm:$0xff] %vm1327, %v1308
  %1340 = vst.msk [vmem:[%s3 + $0x60] sm:$0xff] %vm1327, %v1309
  %1341 = vst.msk [vmem:[%s3 + $0x68] sm:$0xff] %vm1327, %v1310
  // Predicated region
  $region14: #{se_gate_conv1x1.1} parent=0 // pred_check
    _
  $region15: #{se_gate_conv1x1.1} parent=0 // pred_check_branch
    %1343 = sbr.rel (0) target = $region17
  $region16: #{se_gate_conv1x1.1} parent=0 // pred_region
    _
  $region17: #{se_gate_conv1x1.1} parent=0 // pred_fallthru
    _
  // Predicated region
  $region18: #{se_gate_conv1x1.1} parent=0 // pred_check
    _
  $region19: #{se_gate_conv1x1.1} parent=0 // pred_check_branch
    %1345 = sbr.rel (0) target = $region21
  $region20: #{se_gate_conv1x1.1} parent=0 // pred_region
    _
  $region21: #{se_gate_conv1x1.1} parent=0 // pred_fallthru
    _

</llo_original>
